<compile_context>
chip_gen: v5e
topology: v5e:2x2
jax: 0.10.0
libtpu: 0.0.40
codegen_flags: <defaults>
</compile_context>

<pallas_src>
import functools

import jax
import jax.numpy as jnp
from jax.experimental import pallas as pl
from jax.experimental.pallas import tpu as pltpu

EPS = 1e-5
NEG_SLOPE = 0.2


# --------------------------------------------------------------------------- #
# Kernel 1: MAP linear + all planar flows, unrolled in one grid step per batch
# block.  Emits the (already column-permuted) thickness channel and material
# logits as two lane-contiguous outputs.
# --------------------------------------------------------------------------- #
def flows_kernel(z_ref, wmap_ref, bmap_ref, fw_ref, fuh_ref, fb_ref,
                 t_ref, x_ref, *, nf, n_layers):
    # MAP linear.
    z = (jnp.dot(z_ref[...], wmap_ref[...], preferred_element_type=jnp.float32)
         + bmap_ref[...])
    # Planar flows, statically unrolled (u_hat precomputed in the wrapper).
    for l in range(nf):
        w = fw_ref[l]                                             # (1, dim)
        u_hat = fuh_ref[l]                                        # (1, dim)
        b = fb_ref[l]                                             # (1, 1)
        affine = jnp.sum(z * w, axis=1, keepdims=True) + b        # (bB, 1)
        z = z + u_hat * jnp.tanh(affine)
    # Permuted layout: first L columns = thickness channel, rest = mat. logits.
    t_ref[...] = z[:, :n_layers].astype(t_ref.dtype)
    x_ref[...] = z[:, n_layers:].astype(x_ref.dtype)


def planar_flows_forward(z, w_map, b_map, flow_w, flow_u_hat, flow_b,
                         *, n_layers, block_b):
    B, noise_dim = z.shape
    nf, _, dim = flow_w.shape
    assert B % block_b == 0 and (block_b % 8 == 0 or block_b == B)
    lm = dim - n_layers
    kern = functools.partial(flows_kernel, nf=nf, n_layers=n_layers)
    return pl.pallas_call(
        kern,
        out_shape=(jax.ShapeDtypeStruct((B, n_layers), z.dtype),
                   jax.ShapeDtypeStruct((B, lm), z.dtype)),
        grid=(B // block_b,),
        in_specs=[
            pl.BlockSpec((block_b, noise_dim), lambda i: (i, 0)),
            pl.BlockSpec((noise_dim, dim), lambda i: (0, 0)),
            pl.BlockSpec((1, dim), lambda i: (0, 0)),
            pl.BlockSpec((nf, 1, dim), lambda i: (0, 0, 0)),
            pl.BlockSpec((nf, 1, dim), lambda i: (0, 0, 0)),
            pl.BlockSpec((nf, 1, 1), lambda i: (0, 0, 0)),
        ],
        out_specs=(pl.BlockSpec((block_b, n_layers), lambda i: (i, 0)),
                   pl.BlockSpec((block_b, lm), lambda i: (i, 0))),
        compiler_params=pltpu.CompilerParams(dimension_semantics=("parallel",)),
    )(z, w_map, b_map, flow_w, flow_u_hat, flow_b)


# --------------------------------------------------------------------------- #
# Kernel 2 (fused head): FC_thickness (Linear -> LeakyReLU -> BatchNorm1d(train)
# folded into scale/shift -> Linear -> sigmoid*sup) + material softmax + VPU
# broadcast-FMA refractive mixing.  Un-gridded: BN needs full-batch statistics
# and everything fits trivially in VMEM.
# --------------------------------------------------------------------------- #
def head_kernel(alpha_ref, t_ref, x_ref, w1_ref, b1_ref, g_ref, be_ref,
                w2_ref, b2_ref, ndb_ref, th_ref, p_ref, r_ref,
                *, thickness_sup, m_materials):
    # ---- thickness head ----
    h = (jnp.dot(t_ref[...], w1_ref[...], preferred_element_type=jnp.float32)
         + b1_ref[...])
    h = jnp.where(h > 0, h, NEG_SLOPE * h)                  # LeakyReLU(0.2)
    mu = jnp.mean(h, axis=0, keepdims=True)
    var = jnp.mean((h - mu) * (h - mu), axis=0, keepdims=True)
    scale = g_ref[...] * jax.lax.rsqrt(var + EPS)           # BN folded
    shift = be_ref[...] - mu * scale
    h = h * scale + shift
    y = (jnp.dot(h, w2_ref[...], preferred_element_type=jnp.float32)
         + b2_ref[...])
    th_ref[...] = (jax.nn.sigmoid(y) * thickness_sup).astype(th_ref.dtype)

    # ---- material softmax (alpha from SMEM) + refractive mixing on the VPU ----
    a = alpha_ref[0]
    s = x_ref[...] * a                                      # (R, M)
    s = s - jnp.max(s, axis=-1, keepdims=True)
    e = jnp.exp(s)
    p = e / jnp.sum(e, axis=-1, keepdims=True)
    p_ref[...] = p.astype(p_ref.dtype)
    ndb = ndb_ref[...]                                      # (M, F)
    r = jnp.zeros((p.shape[0], ndb.shape[1]), jnp.float32)
    for m in range(m_materials):                            # M broadcast-FMAs
        r = r + p[:, m:m + 1] * ndb[m:m + 1, :]
    r_ref[...] = r.astype(r_ref.dtype)


def thickness_softmax_head(alpha_arr, t_in, x_rows, w1, b1, gamma, beta, w2, b2,
                           n_db, *, thickness_sup):
    B, L = t_in.shape
    R, M = x_rows.shape
    F = n_db.shape[1]
    full = lambda shape: pl.BlockSpec(shape, lambda: (0,) * len(shape),
                                      memory_space=pltpu.MemorySpace.VMEM)
    kern = functools.partial(head_kernel, thickness_sup=thickness_sup,
                             m_materials=M)
    return pl.pallas_call(
        kern,
        out_shape=(jax.ShapeDtypeStruct((B, L), t_in.dtype),
                   jax.ShapeDtypeStruct((R, M), x_rows.dtype),
                   jax.ShapeDtypeStruct((R, F), x_rows.dtype)),
        in_specs=[pl.BlockSpec(memory_space=pltpu.MemorySpace.SMEM),
                  full(t_in.shape), full(x_rows.shape),
                  full(w1.shape), full(b1.shape),
                  full(gamma.shape), full(beta.shape),
                  full(w2.shape), full(b2.shape), full(n_db.shape)],
        out_specs=(full((B, L)), full((R, M)), full((R, F))),
    )(alpha_arr, t_in, x_rows, w1, b1, gamma, beta, w2, b2, n_db)


# --------------------------------------------------------------------------- #
# Full GeneratorNF.forward
# --------------------------------------------------------------------------- #
def _pick_batch_block(batch):
    """One batch block per TensorCore: 2 blocks on v7x (2 TCs), 1 otherwise."""
    try:
        kind = jax.devices()[0].device_kind.lower()
    except Exception:
        kind = ""
    if "v7" in kind and batch % 16 == 0:
        return batch // 2
    return batch


def generator_nf_forward(z, alpha, params):
    L = params["w_fc1"].shape[0]            # N_layers
    M, F = params["n_db"].shape             # M_materials, n_freq
    B = z.shape[0]
    dim = params["w_map"].shape[1]
    assert dim == L * (M + 1)

    # --- param prep (would be done once, offline, in production) ------------
    flow_w, flow_u, flow_b = params["flow_w"], params["flow_u"], params["flow_b"]
    # u_hat = u + (softplus(w.u) - 1 - w.u) * w / ||w||    (stable softplus)
    wu = jnp.sum(flow_w * flow_u, axis=-1, keepdims=True)            # (NF,1,1)
    m_wu = -1.0 + jax.nn.softplus(wu)
    inv_norm = 1.0 / jnp.sqrt(jnp.sum(flow_w * flow_w, axis=-1, keepdims=True))
    flow_u_hat = flow_u + (m_wu - wu) * inv_norm * flow_w             # (NF,1,dim)

    # Column permutation: [t_in(L) | x_mat(L*M, l-major m-minor)].
    idx = jnp.arange(dim).reshape(L, M + 1)
    perm = jnp.concatenate([idx[:, 0], idx[:, 1:].reshape(-1)])
    w_map_p = params["w_map"][:, perm]
    b_map_p = params["b_map"][:, perm]
    flow_w_p = flow_w[:, :, perm]
    flow_u_hat_p = flow_u_hat[:, :, perm]

    # --- kernel 1: MAP + planar flows ---------------------------------------
    block_b = _pick_batch_block(B)
    t_in, x_flat = planar_flows_forward(
        z, w_map_p, b_map_p, flow_w_p, flow_u_hat_p, flow_b,
        n_layers=L, block_b=block_b)
    x_rows = x_flat.reshape(B * L, M)        # contiguous row-major reshape

    # --- kernel 2: fused thickness head + softmax + refractive mixing -------
    alpha_arr = jnp.asarray([alpha], dtype=jnp.float32)
    thick, p_rows, r_rows = thickness_softmax_head(
        alpha_arr, t_in, x_rows,
        params["w_fc1"], params["b_fc1"], params["g_bn"], params["b_bn"],
        params["w_fc2"], params["b_fc2"], params["n_db"],
        thickness_sup=params["thickness_sup"])

    P = p_rows.reshape(B, L, M)
    refractive_indices = r_rows.reshape(B, L, F)
    return thick, refractive_indices, P


# --------------------------------------------------------------------------- #
# Pure-JAX reference with identical semantics (training-mode BN, no LDJ output).
# --------------------------------------------------------------------------- #
def reference_forward(z, alpha, params):
    hp = jax.lax.Precision.HIGHEST
    L = params["w_fc1"].shape[0]
    M, _ = params["n_db"].shape

    z = jnp.dot(z, params["w_map"], precision=hp) + params["b_map"]
    for l in range(params["flow_w"].shape[0]):
        w = params["flow_w"][l]              # (1, dim)
        u = params["flow_u"][l]
        b = params["flow_b"][l, 0, 0]
        wu = jnp.sum(w * u)
        u_hat = u + ((-1.0 + jax.nn.softplus(wu)) - wu) * w / jnp.sqrt(jnp.sum(w * w))
        affine = jnp.sum(z * w, axis=1, keepdims=True) + b
        z = z + u_hat * jnp.tanh(affine)

    B = z.shape[0]
    net = z.reshape(B, L, M + 1)
    t_in = net[:, :, 0]
    h = jnp.dot(t_in, params["w_fc1"], precision=hp) + params["b_fc1"]
    h = jnp.where(h > 0, h, NEG_SLOPE * h)
    mu = h.mean(0, keepdims=True)
    var = ((h - mu) ** 2).mean(0, keepdims=True)
    h = (h - mu) / jnp.sqrt(var + EPS) * params["g_bn"] + params["b_bn"]
    y = jnp.dot(h, params["w_fc2"], precision=hp) + params["b_fc2"]
    thick = jax.nn.sigmoid(y) * params["thickness_sup"]

    X = net[:, :, 1:]
    P = jax.nn.softmax(X * alpha, axis=2)
    refr = jnp.einsum("blm,mf->blf", P, params["n_db"], precision=hp)
    return thick, refr, P


if __name__ == "__main__":
    # Small demo hyper-parameters (dim = N_layers*(M_materials+1) = 128, lane-dense)
    N_layers = 16
    M_materials = 7
    noise_dim = 64
    NF_layers = 4
    n_freq = 8
    thickness_sup = 150.0
    alpha = 5.0
    B = 16
    dim = N_layers * (M_materials + 1)

    key = jax.random.PRNGKey(0)
    ks = jax.random.split(key, 13)

    z = jax.random.normal(ks[0], (B, noise_dim), dtype=jnp.float32)
    params = dict(
        # MAP = nn.Linear(noise_dim, dim); weight pre-transposed to (in, out)
        w_map=0.05 * jax.random.normal(ks[1], (noise_dim, dim), dtype=jnp.float32),
        b_map=0.05 * jax.random.normal(ks[2], (1, dim), dtype=jnp.float32),
        # Planar_flow params (u, w, b ~ 0.01 * randn), stacked over NF_layers
        flow_u=0.01 * jax.random.normal(ks[3], (NF_layers, 1, dim), dtype=jnp.float32),
        flow_w=0.01 * jax.random.normal(ks[4], (NF_layers, 1, dim), dtype=jnp.float32),
        flow_b=0.01 * jax.random.normal(ks[5], (NF_layers, 1, 1), dtype=jnp.float32),
        # FC_thickness: Linear(L,16) -> LeakyReLU -> BatchNorm1d(16) -> Linear(16,L)
        w_fc1=0.1 * jax.random.normal(ks[6], (N_layers, 16), dtype=jnp.float32),
        b_fc1=0.1 * jax.random.normal(ks[7], (1, 16), dtype=jnp.float32),
        g_bn=1.0 + 0.1 * jax.random.normal(ks[8], (1, 16), dtype=jnp.float32),
        b_bn=0.1 * jax.random.normal(ks[9], (1, 16), dtype=jnp.float32),
        w_fc2=0.1 * jax.random.normal(ks[10], (16, N_layers), dtype=jnp.float32),
        b_fc2=0.1 * jax.random.normal(ks[11], (1, N_layers), dtype=jnp.float32),
        # n_database as (M_materials, n_freq)
        n_db=1.5 + jax.random.uniform(ks[12], (M_materials, n_freq), dtype=jnp.float32),
        thickness_sup=thickness_sup,
    )

    thick, refr, P = generator_nf_forward(z, alpha, params)
    jax.block_until_ready((thick, refr, P))

    thick_r, refr_r, P_r = reference_forward(z, alpha, params)

    assert thick.shape == (B, N_layers)
    assert refr.shape == (B, N_layers, n_freq)
    assert P.shape == (B, N_layers, M_materials)
    assert jnp.allclose(thick, thick_r, atol=1e-3, rtol=1e-3), "thickness mismatch"
    assert jnp.allclose(refr, refr_r, atol=1e-3, rtol=1e-3), "refractive mismatch"
    assert jnp.allclose(P, P_r, atol=1e-3, rtol=1e-3), "P mismatch"

    print("KERNEL_OK")
</pallas_src>

<mosaic_0001>
module attributes {stable_mosaic.version = 11 : i64} {
  func.func @flows_kernel(%arg0: i32, %arg1: memref<16x64xf32, #tpu.memory_space<vmem>>, %arg2: memref<64x128xf32, #tpu.memory_space<vmem>>, %arg3: memref<1x128xf32, #tpu.memory_space<vmem>>, %arg4: memref<4x1x128xf32, #tpu.memory_space<vmem>>, %arg5: memref<4x1x128xf32, #tpu.memory_space<vmem>>, %arg6: memref<4x1x1xf32, #tpu.memory_space<vmem>>, %arg7: memref<16x16xf32, #tpu.memory_space<vmem>>, %arg8: memref<16x112xf32, #tpu.memory_space<vmem>>) attributes {dimension_semantics = [#tpu.dimension_semantics<parallel>], iteration_bounds = array<i64: 1>, scalar_prefetch = 0 : i64, scratch_operands = 0 : i64, tpu.core_type = #tpu.core_type<tc>, window_params = [{transform_indices = @transform_0, window_bounds = array<i64: 16, 64>}, {pipeline_mode = #tpu.pipeline_mode<synchronous>, transform_indices = @transform_1, window_bounds = array<i64: 64, 128>}, {pipeline_mode = #tpu.pipeline_mode<synchronous>, transform_indices = @transform_2, window_bounds = array<i64: 1, 128>}, {pipeline_mode = #tpu.pipeline_mode<synchronous>, transform_indices = @transform_3, window_bounds = array<i64: 4, 1, 128>}, {pipeline_mode = #tpu.pipeline_mode<synchronous>, transform_indices = @transform_4, window_bounds = array<i64: 4, 1, 128>}, {pipeline_mode = #tpu.pipeline_mode<synchronous>, transform_indices = @transform_5, window_bounds = array<i64: 4, 1, 1>}, {transform_indices = @transform_6, window_bounds = array<i64: 16, 16>}, {transform_indices = @transform_7, window_bounds = array<i64: 16, 112>}]} {
    %c0 = arith.constant 0 : index
    %c0_0 = arith.constant 0 : index
    %0 = vector.load %arg1[%c0, %c0_0] : memref<16x64xf32, #tpu.memory_space<vmem>>, vector<16x64xf32>
    %c0_1 = arith.constant 0 : index
    %c0_2 = arith.constant 0 : index
    %1 = vector.load %arg2[%c0_1, %c0_2] : memref<64x128xf32, #tpu.memory_space<vmem>>, vector<64x128xf32>
    %cst = arith.constant dense<0.000000e+00> : vector<16x128xf32>
    %2 = tpu.matmul %0, %1, %cst {dimension_numbers = #tpu.dot_dimension_numbers<[1], [0], [0], [1], [0, 0, 1, 1], [], []>} : vector<16x64xf32>, vector<64x128xf32>, vector<16x128xf32> -> vector<16x128xf32>
    %c0_3 = arith.constant 0 : index
    %c0_4 = arith.constant 0 : index
    %3 = vector.load %arg3[%c0_3, %c0_4] : memref<1x128xf32, #tpu.memory_space<vmem>>, vector<1x128xf32>
    %4 = vector.broadcast %3 : vector<1x128xf32> to vector<16x128xf32>
    %5 = arith.addf %2, %4 : vector<16x128xf32>
    %c0_5 = arith.constant 0 : index
    %c0_6 = arith.constant 0 : index
    %c0_7 = arith.constant 0 : index
    %6 = vector.load %arg4[%c0_5, %c0_6, %c0_7] : memref<4x1x128xf32, #tpu.memory_space<vmem>>, vector<1x1x128xf32>
    %7 = vector.shape_cast %6 : vector<1x1x128xf32> to vector<1x128xf32>
    %c0_8 = arith.constant 0 : index
    %c0_9 = arith.constant 0 : index
    %c0_10 = arith.constant 0 : index
    %8 = vector.load %arg5[%c0_8, %c0_9, %c0_10] : memref<4x1x128xf32, #tpu.memory_space<vmem>>, vector<1x1x128xf32>
    %9 = vector.shape_cast %8 : vector<1x1x128xf32> to vector<1x128xf32>
    %c0_11 = arith.constant 0 : index
    %c0_12 = arith.constant 0 : index
    %c0_13 = arith.constant 0 : index
    %10 = vector.load %arg6[%c0_11, %c0_12, %c0_13] : memref<4x1x1xf32, #tpu.memory_space<vmem>>, vector<1x1x1xf32>
    %11 = vector.shape_cast %10 : vector<1x1x1xf32> to vector<1x1xf32>
    %12 = vector.broadcast %7 : vector<1x128xf32> to vector<16x128xf32>
    %13 = arith.mulf %5, %12 : vector<16x128xf32>
    %cst_14 = arith.constant dense<0.000000e+00> : vector<16xf32>
    %14 = vector.multi_reduction <add>, %13, %cst_14 [1] : vector<16x128xf32> to vector<16xf32>
    %15 = vector.shape_cast %14 : vector<16xf32> to vector<16x1xf32>
    %16 = vector.broadcast %11 : vector<1x1xf32> to vector<16x1xf32>
    %17 = arith.addf %15, %16 : vector<16x1xf32>
    %18 = math.tanh %17 : vector<16x1xf32>
    %19 = vector.broadcast %9 : vector<1x128xf32> to vector<16x128xf32>
    %20 = vector.broadcast %18 : vector<16x1xf32> to vector<16x128xf32>
    %21 = arith.mulf %19, %20 : vector<16x128xf32>
    %22 = arith.addf %5, %21 : vector<16x128xf32>
    %c1 = arith.constant 1 : index
    %c0_15 = arith.constant 0 : index
    %c0_16 = arith.constant 0 : index
    %23 = vector.load %arg4[%c1, %c0_15, %c0_16] : memref<4x1x128xf32, #tpu.memory_space<vmem>>, vector<1x1x128xf32>
    %24 = vector.shape_cast %23 : vector<1x1x128xf32> to vector<1x128xf32>
    %c1_17 = arith.constant 1 : index
    %c0_18 = arith.constant 0 : index
    %c0_19 = arith.constant 0 : index
    %25 = vector.load %arg5[%c1_17, %c0_18, %c0_19] : memref<4x1x128xf32, #tpu.memory_space<vmem>>, vector<1x1x128xf32>
    %26 = vector.shape_cast %25 : vector<1x1x128xf32> to vector<1x128xf32>
    %c1_20 = arith.constant 1 : index
    %c0_21 = arith.constant 0 : index
    %c0_22 = arith.constant 0 : index
    %27 = vector.load %arg6[%c1_20, %c0_21, %c0_22] : memref<4x1x1xf32, #tpu.memory_space<vmem>>, vector<1x1x1xf32>
    %28 = vector.shape_cast %27 : vector<1x1x1xf32> to vector<1x1xf32>
    %29 = vector.broadcast %24 : vector<1x128xf32> to vector<16x128xf32>
    %30 = arith.mulf %22, %29 : vector<16x128xf32>
    %cst_23 = arith.constant dense<0.000000e+00> : vector<16xf32>
    %31 = vector.multi_reduction <add>, %30, %cst_23 [1] : vector<16x128xf32> to vector<16xf32>
    %32 = vector.shape_cast %31 : vector<16xf32> to vector<16x1xf32>
    %33 = vector.broadcast %28 : vector<1x1xf32> to vector<16x1xf32>
    %34 = arith.addf %32, %33 : vector<16x1xf32>
    %35 = math.tanh %34 : vector<16x1xf32>
    %36 = vector.broadcast %26 : vector<1x128xf32> to vector<16x128xf32>
    %37 = vector.broadcast %35 : vector<16x1xf32> to vector<16x128xf32>
    %38 = arith.mulf %36, %37 : vector<16x128xf32>
    %39 = arith.addf %22, %38 : vector<16x128xf32>
    %c2 = arith.constant 2 : index
    %c0_24 = arith.constant 0 : index
    %c0_25 = arith.constant 0 : index
    %40 = vector.load %arg4[%c2, %c0_24, %c0_25] : memref<4x1x128xf32, #tpu.memory_space<vmem>>, vector<1x1x128xf32>
    %41 = vector.shape_cast %40 : vector<1x1x128xf32> to vector<1x128xf32>
    %c2_26 = arith.constant 2 : index
    %c0_27 = arith.constant 0 : index
    %c0_28 = arith.constant 0 : index
    %42 = vector.load %arg5[%c2_26, %c0_27, %c0_28] : memref<4x1x128xf32, #tpu.memory_space<vmem>>, vector<1x1x128xf32>
    %43 = vector.shape_cast %42 : vector<1x1x128xf32> to vector<1x128xf32>
    %c2_29 = arith.constant 2 : index
    %c0_30 = arith.constant 0 : index
    %c0_31 = arith.constant 0 : index
    %44 = vector.load %arg6[%c2_29, %c0_30, %c0_31] : memref<4x1x1xf32, #tpu.memory_space<vmem>>, vector<1x1x1xf32>
    %45 = vector.shape_cast %44 : vector<1x1x1xf32> to vector<1x1xf32>
    %46 = vector.broadcast %41 : vector<1x128xf32> to vector<16x128xf32>
    %47 = arith.mulf %39, %46 : vector<16x128xf32>
    %cst_32 = arith.constant dense<0.000000e+00> : vector<16xf32>
    %48 = vector.multi_reduction <add>, %47, %cst_32 [1] : vector<16x128xf32> to vector<16xf32>
    %49 = vector.shape_cast %48 : vector<16xf32> to vector<16x1xf32>
    %50 = vector.broadcast %45 : vector<1x1xf32> to vector<16x1xf32>
    %51 = arith.addf %49, %50 : vector<16x1xf32>
    %52 = math.tanh %51 : vector<16x1xf32>
    %53 = vector.broadcast %43 : vector<1x128xf32> to vector<16x128xf32>
    %54 = vector.broadcast %52 : vector<16x1xf32> to vector<16x128xf32>
    %55 = arith.mulf %53, %54 : vector<16x128xf32>
    %56 = arith.addf %39, %55 : vector<16x128xf32>
    %c3 = arith.constant 3 : index
    %c0_33 = arith.constant 0 : index
    %c0_34 = arith.constant 0 : index
    %57 = vector.load %arg4[%c3, %c0_33, %c0_34] : memref<4x1x128xf32, #tpu.memory_space<vmem>>, vector<1x1x128xf32>
    %58 = vector.shape_cast %57 : vector<1x1x128xf32> to vector<1x128xf32>
    %c3_35 = arith.constant 3 : index
    %c0_36 = arith.constant 0 : index
    %c0_37 = arith.constant 0 : index
    %59 = vector.load %arg5[%c3_35, %c0_36, %c0_37] : memref<4x1x128xf32, #tpu.memory_space<vmem>>, vector<1x1x128xf32>
    %60 = vector.shape_cast %59 : vector<1x1x128xf32> to vector<1x128xf32>
    %c3_38 = arith.constant 3 : index
    %c0_39 = arith.constant 0 : index
    %c0_40 = arith.constant 0 : index
    %61 = vector.load %arg6[%c3_38, %c0_39, %c0_40] : memref<4x1x1xf32, #tpu.memory_space<vmem>>, vector<1x1x1xf32>
    %62 = vector.shape_cast %61 : vector<1x1x1xf32> to vector<1x1xf32>
    %63 = vector.broadcast %58 : vector<1x128xf32> to vector<16x128xf32>
    %64 = arith.mulf %56, %63 : vector<16x128xf32>
    %cst_41 = arith.constant dense<0.000000e+00> : vector<16xf32>
    %65 = vector.multi_reduction <add>, %64, %cst_41 [1] : vector<16x128xf32> to vector<16xf32>
    %66 = vector.shape_cast %65 : vector<16xf32> to vector<16x1xf32>
    %67 = vector.broadcast %62 : vector<1x1xf32> to vector<16x1xf32>
    %68 = arith.addf %66, %67 : vector<16x1xf32>
    %69 = math.tanh %68 : vector<16x1xf32>
    %70 = vector.broadcast %60 : vector<1x128xf32> to vector<16x128xf32>
    %71 = vector.broadcast %69 : vector<16x1xf32> to vector<16x128xf32>
    %72 = arith.mulf %70, %71 : vector<16x128xf32>
    %73 = arith.addf %56, %72 : vector<16x128xf32>
    %74 = vector.extract_strided_slice %73 {offsets = [0, 0], sizes = [16, 16], strides = [1, 1]} : vector<16x128xf32> to vector<16x16xf32>
    %c0_42 = arith.constant 0 : index
    %c0_43 = arith.constant 0 : index
    %75 = vector.load %arg7[%c0_42, %c0_43] : memref<16x16xf32, #tpu.memory_space<vmem>>, vector<16x16xf32>
    tpu.vector_store %arg7[%c0_42, %c0_43], %74 {strides = array<i32>} : memref<16x16xf32, #tpu.memory_space<vmem>>, vector<16x16xf32>,
    %76 = vector.extract_strided_slice %73 {offsets = [0, 16], sizes = [16, 112], strides = [1, 1]} : vector<16x128xf32> to vector<16x112xf32>
    %c0_44 = arith.constant 0 : index
    %c0_45 = arith.constant 0 : index
    %77 = vector.load %arg8[%c0_44, %c0_45] : memref<16x112xf32, #tpu.memory_space<vmem>>, vector<16x112xf32>
    tpu.vector_store %arg8[%c0_44, %c0_45], %76 {strides = array<i32>} : memref<16x112xf32, #tpu.memory_space<vmem>>, vector<16x112xf32>,
    return
  }
  func.func @transform_0(%arg0: i32) -> (i32, i32) {
    %c0_i32 = arith.constant 0 : i32
    %c0_i32_0 = arith.constant 0 : i32
    return %arg0, %c0_i32 : i32, i32
  }
  func.func @transform_1(%arg0: i32) -> (i32, i32) {
    %c0_i32 = arith.constant 0 : i32
    %c0_i32_0 = arith.constant 0 : i32
    %c0_i32_1 = arith.constant 0 : i32
    return %c0_i32, %c0_i32_0 : i32, i32
  }
  func.func @transform_2(%arg0: i32) -> (i32, i32) {
    %c0_i32 = arith.constant 0 : i32
    %c0_i32_0 = arith.constant 0 : i32
    %c0_i32_1 = arith.constant 0 : i32
    return %c0_i32, %c0_i32_0 : i32, i32
  }
  func.func @transform_3(%arg0: i32) -> (i32, i32, i32) {
    %c0_i32 = arith.constant 0 : i32
    %c0_i32_0 = arith.constant 0 : i32
    %c0_i32_1 = arith.constant 0 : i32
    %c0_i32_2 = arith.constant 0 : i32
    return %c0_i32, %c0_i32_0, %c0_i32_1 : i32, i32, i32
  }
  func.func @transform_4(%arg0: i32) -> (i32, i32, i32) {
    %c0_i32 = arith.constant 0 : i32
    %c0_i32_0 = arith.constant 0 : i32
    %c0_i32_1 = arith.constant 0 : i32
    %c0_i32_2 = arith.constant 0 : i32
    return %c0_i32, %c0_i32_0, %c0_i32_1 : i32, i32, i32
  }
  func.func @transform_5(%arg0: i32) -> (i32, i32, i32) {
    %c0_i32 = arith.constant 0 : i32
    %c0_i32_0 = arith.constant 0 : i32
    %c0_i32_1 = arith.constant 0 : i32
    %c0_i32_2 = arith.constant 0 : i32
    return %c0_i32, %c0_i32_0, %c0_i32_1 : i32, i32, i32
  }
  func.func @transform_6(%arg0: i32) -> (i32, i32) {
    %c0_i32 = arith.constant 0 : i32
    %c0_i32_0 = arith.constant 0 : i32
    return %arg0, %c0_i32 : i32, i32
  }
  func.func @transform_7(%arg0: i32) -> (i32, i32) {
    %c0_i32 = arith.constant 0 : i32
    %c0_i32_0 = arith.constant 0 : i32
    return %arg0, %c0_i32 : i32, i32
  }
}

</mosaic_0001>

<llo_original>
// kernel: tpu_custom_call.1
$region0: #{tpu_custom_call.1}
  #allocation0 [shape = 'u32[]', space=smem, size = 0x4, offset = 0x4, fixed_abs, tag = 'smem constant byte address 0x4 - core index']
  #allocation1 [shape = 'u32[72,128]{1,0:T(1,128)}', space=vmem, size = 0x9000, scoped, tag = 'internal scratch']
  %s0 = inlined_call_operand.hbm [shape: f32[16,64], index: 0, kind: input, shape index: {}]
  %s1 = inlined_call_operand.hbm [shape: f32[64,128], index: 1, kind: input, shape index: {}]
  %s2 = inlined_call_operand.vmem [shape: f32[1,128], index: 2, kind: input, shape index: {}]
  %s3 = inlined_call_operand.vmem [shape: f32[4,1,128], index: 3, kind: input, shape index: {}]
  %s4 = inlined_call_operand.hbm [shape: f32[4,1,128], index: 4, kind: input, shape index: {}]
  %s5 = inlined_call_operand.vmem [shape: f32[4,1,1], index: 5, kind: input, shape index: {}]
  %s6 = inlined_call_operand.hbm [shape: f32[16,16], index: 6, kind: output, shape index: {0}]
  %s7 = inlined_call_operand.hbm [shape: f32[16,112], index: 7, kind: output, shape index: {1}]
  %8 = xla_tuple %s6, %s7
  %s9 = sld [smem:[#allocation0]]
  $region54: #{tpu_custom_call.1} parent=0
    _
  %s11 = ssub.s32 1, %s9
  %s12 = scalar_select 0, %s11, %s9
  $region1: #{tpu_custom_call.1} parent=0
    #allocation2 [shape = 'u8[8192]{0}', space=vmem, size = 0x2000, scoped, tag = 'input window, operand 0, single buffered']
    #allocation3 [shape = 's32[1]{0}', space=sflag, size = 0x4, scoped, tag = 'scoped memory for tpu_custom_call.1']
    #allocation4 [shape = 's32[1]{0}', space=sflag, size = 0x4, scoped, tag = 'scoped memory for tpu_custom_call.1']
    #allocation5 [shape = 'u8[32768]{0}', space=vmem, size = 0x8000, scoped, tag = 'input window, operand 1, single buffered']
    #allocation6 [shape = 's32[1]{0}', space=sflag, size = 0x4, scoped, tag = 'scoped memory for tpu_custom_call.1']
    #allocation7 [shape = 'u8[2048]{0}', space=vmem, size = 0x800, scoped, tag = 'input window, operand 4, single buffered']
    #allocation8 [shape = 'u8[8192]{0}', space=vmem, size = 0x2000, scoped, tag = 'output window, operand 0, single buffered']
    #allocation9 [shape = 'u8[8192]{0}', space=vmem, size = 0x2000, scoped, tag = 'output window, operand 1, single buffered']
    #allocation10 [shape = 's32[1]{0}', space=sflag, size = 0x4, scoped, tag = 'scoped memory for tpu_custom_call.1']
    %13 = vsyncpa [#allocation3], 0
    %14 = vsyncpa [#allocation6], 0
    %15 = vsyncpa [#allocation4], 0
    %16 = vsyncpa [#allocation10], 0
    // Predicated region
    $region2: #{tpu_custom_call.1} parent=1 // pred_check
      _
    $region3: #{tpu_custom_call.1} parent=1 // pred_check_branch
      %18 = sbr.rel (0) target = $region5
    $region4: #{tpu_custom_call.1} parent=1 // pred_region
      %20 = vsyncadd [#allocation3], 0
      %s21 = sshll.u32 %s0, 4
      %s22 = int_to_ptr.hbm [resolvable:$true] %s21
      %s23 = sshll.u32 [#allocation2], 4
      %s24 = int_to_ptr.vmem [resolvable:$true] %s23
      %29 = dma.hbm_to_vmem [thread:$0]  %s22, 256, %s24, [#allocation3], 128, 128, 8
    $region5: #{tpu_custom_call.1} parent=1 // pred_fallthru
      _
    // Predicated region
    $region6: #{tpu_custom_call.1} parent=1 // pred_check
      _
    $region7: #{tpu_custom_call.1} parent=1 // pred_check_branch
      %31 = sbr.rel (0) target = $region9
    $region8: #{tpu_custom_call.1} parent=1 // pred_region
      %33 = vsyncadd [#allocation6], 0
      %s34 = sshll.u32 %s1, 4
      %s35 = int_to_ptr.hbm [resolvable:$true] %s34
      %s36 = sshll.u32 [#allocation5], 4
      %s37 = int_to_ptr.vmem [resolvable:$true] %s36
      %42 = dma.hbm_to_vmem [thread:$0]  %s35, 1024, %s37, [#allocation6], 128, 128, 8
    $region9: #{tpu_custom_call.1} parent=1 // pred_fallthru
      _
    // Predicated region
    $region10: #{tpu_custom_call.1} parent=1 // pred_check
      _
    $region11: #{tpu_custom_call.1} parent=1 // pred_check_branch
      %44 = sbr.rel (0) target = $region13
    $region12: #{tpu_custom_call.1} parent=1 // pred_region
      _
    $region13: #{tpu_custom_call.1} parent=1 // pred_fallthru
      _
    // Predicated region
    $region14: #{tpu_custom_call.1} parent=1 // pred_check
      _
    $region15: #{tpu_custom_call.1} parent=1 // pred_check_branch
      %46 = sbr.rel (0) target = $region17
    $region16: #{tpu_custom_call.1} parent=1 // pred_region
      _
    $region17: #{tpu_custom_call.1} parent=1 // pred_fallthru
      _
    // Predicated region
    $region18: #{tpu_custom_call.1} parent=1 // pred_check
      _
    $region19: #{tpu_custom_call.1} parent=1 // pred_check_branch
      %48 = sbr.rel (0) target = $region21
    $region20: #{tpu_custom_call.1} parent=1 // pred_region
      %50 = vsyncadd [#allocation6], 0
      %s51 = sshll.u32 %s4, 4
      %s52 = int_to_ptr.hbm [resolvable:$true] %s51
      %s53 = sshll.u32 [#allocation7], 4
      %s54 = int_to_ptr.vmem [resolvable:$true] %s53
      %59 = dma.hbm_to_vmem [thread:$0]  %s52, 64, %s54, [#allocation6], 16, 16, 1
    $region21: #{tpu_custom_call.1} parent=1 // pred_fallthru
      _
    // Predicated region
    $region22: #{tpu_custom_call.1} parent=1 // pred_check
      _
    $region23: #{tpu_custom_call.1} parent=1 // pred_check_branch
      %61 = sbr.rel (0) target = $region25
    $region24: #{tpu_custom_call.1} parent=1 // pred_region
      _
    $region25: #{tpu_custom_call.1} parent=1 // pred_fallthru
      _
    // Predicated region
    $region26: #{tpu_custom_call.1} parent=1 // pred_check
      _
    $region27: #{tpu_custom_call.1} parent=1 // pred_check_branch
      %63 = sbr.rel (0) target = $region29
    $region28: #{tpu_custom_call.1} parent=1 // pred_region
      %65 = dma.done [#allocation3], 256
    $region29: #{tpu_custom_call.1} parent=1 // pred_fallthru
      _
    // Predicated region
    $region30: #{tpu_custom_call.1} parent=1 // pred_check
      _
    $region31: #{tpu_custom_call.1} parent=1 // pred_check_branch
      %67 = sbr.rel (0) target = $region33
    $region32: #{tpu_custom_call.1} parent=1 // pred_region
      %69 = dma.done [#allocation6], 1024
    $region33: #{tpu_custom_call.1} parent=1 // pred_fallthru
      _
    // Predicated region
    $region34: #{tpu_custom_call.1} parent=1 // pred_check
      _
    $region35: #{tpu_custom_call.1} parent=1 // pred_check_branch
      %71 = sbr.rel (0) target = $region37
    $region36: #{tpu_custom_call.1} parent=1 // pred_region
      %73 = dma.done [#allocation6], 64
    $region37: #{tpu_custom_call.1} parent=1 // pred_fallthru
      _
    %v74 = vld [vmem:[#allocation2] sm:$0xff]
    %v75 = vld [vmem:[#allocation2 + $0x8] sm:$0xff]
    %v76 = vld [vmem:[#allocation5] sm:$0xff]
    %v77 = vld [vmem:[#allocation5 + $0x8] sm:$0xff]
    %v78 = vld [vmem:[#allocation5 + $0x10] sm:$0xff]
    %v79 = vld [vmem:[#allocation5 + $0x18] sm:$0xff]
    %v80 = vld [vmem:[#allocation5 + $0x20] sm:$0xff]
    %v81 = vld [vmem:[#allocation5 + $0x28] sm:$0xff]
    %v82 = vld [vmem:[#allocation5 + $0x30] sm:$0xff]
    %v83 = vld [vmem:[#allocation5 + $0x38] sm:$0xff]
    %v84 = vld [vmem:[%s2] sm:$0x1]
    %v86 = vperm.slane %v84, 0
    %vm88 = vcmask 523264
    %v90 = vsel %vm88, %v74, 0
    %v93 = vsel %vm88, %v75, 0
    %95 = vmatpush.msra.mxu0 0.0
    %96 = vmatpush.msra.mxu0 0.0
    %97 = vmatpush.msra.mxu0 0.0
    %98 = vmatpush.msra.mxu0 0.0
    %99 = vmatpush.msra.mxu0 0.0
    %100 = vmatpush.msra.mxu0 0.0
    %101 = vmatpush.msra.mxu0 0.0
    %102 = vmatpush.msra.mxu0 0.0
    %103 = vmatpush.msra.mxu0 %v83
    %104 = vmatpush.msra.mxu0 %v82
    %105 = vmatpush.msra.mxu0 %v81
    %106 = vmatpush.msra.mxu0 %v80
    %107 = vmatpush.msra.mxu0 %v79
    %108 = vmatpush.msra.mxu0 %v78
    %109 = vmatpush.msra.mxu0 %v77
    %110 = vmatpush.msra.mxu0 %v76
    %111 = vmatmul.f32.gmra.mxu0 %v90
    %v112 = vpop.f32.mrf.mxu0
    %v113 = vadd.f32 %v86, %v112
    %114 = vmatmul.f32.gmra.mxu0 %v93
    %v115 = vpop.f32.mrf.mxu0
    %v116 = vadd.f32 %v86, %v115
    %117 = vdwg.mxu0
    %v118 = vld [vmem:[%s3] sm:$0x1]
    %v119 = vld [vmem:[#allocation7] sm:$0x1]
    %v120 = vld [vmem:[%s5] sm:$0x1]
    %v122 = vperm.slane %v118, 0
    %v124 = vmul.f32 %v113, %v122
    %v125 = vmul.f32 %v116, %v122
    %126 = vadd.xlane.f32.xlu0 %v124
    %v127 = vpop.xlane.xlu0 %126
    %128 = vadd.xlane.f32.xlu0 %v125
    %v129 = vpop.xlane.xlu0 %128
    %v131 = vperm.slane %v120, 0
    %v133 = vadd.f32 %v127, %v131
    %v134 = vadd.f32 %v129, %v131
    %v135 = vtanh.pop %v133
    %v136 = vtanh.pop %v134
    %v138 = vperm.slane %v119, 0
    %141 = vset.pattern.permute.xlu0 0
    %142 = vperm.xlu0 %141, %v135
    %v143 = vpop.permute.xlu0 %142
    %146 = vset.pattern.permute.xlu0 0
    %147 = vperm.xlu0 %146, %v136
    %v148 = vpop.permute.xlu0 %147
    %v150 = vmul.f32 %v138, %v143
    %v151 = vmul.f32 %v138, %v148
    %v152 = vadd.f32 %v113, %v150
    %v153 = vadd.f32 %v116, %v151
    %s154 = scalar_lea.vmem %s3, 1
    %v155 = vld [vmem:[%s154] sm:$0x1]
    %s156 = scalar_lea.vmem [#allocation7], 1
    %v157 = vld [vmem:[%s156] sm:$0x1]
    %s158 = scalar_lea.vmem %s5, 1
    %v159 = vld [vmem:[%s158] sm:$0x1]
    %v161 = vperm.slane %v155, 0
    %v163 = vmul.f32 %v152, %v161
    %v164 = vmul.f32 %v153, %v161
    %165 = vadd.xlane.f32.xlu0 %v163
    %v166 = vpop.xlane.xlu0 %165
    %167 = vadd.xlane.f32.xlu0 %v164
    %v168 = vpop.xlane.xlu0 %167
    %v170 = vperm.slane %v159, 0
    %v172 = vadd.f32 %v166, %v170
    %v173 = vadd.f32 %v168, %v170
    %v174 = vtanh.pop %v172
    %v175 = vtanh.pop %v173
    %v177 = vperm.slane %v157, 0
    %180 = vset.pattern.permute.xlu0 0
    %181 = vperm.xlu0 %180, %v174
    %v182 = vpop.permute.xlu0 %181
    %185 = vset.pattern.permute.xlu0 0
    %186 = vperm.xlu0 %185, %v175
    %v187 = vpop.permute.xlu0 %186
    %v189 = vmul.f32 %v177, %v182
    %v190 = vmul.f32 %v177, %v187
    %v191 = vadd.f32 %v152, %v189
    %v192 = vadd.f32 %v153, %v190
    %s193 = scalar_lea.vmem %s3, 2
    %v194 = vld [vmem:[%s193] sm:$0x1]
    %s195 = scalar_lea.vmem [#allocation7], 2
    %v196 = vld [vmem:[%s195] sm:$0x1]
    %s197 = scalar_lea.vmem %s5, 2
    %v198 = vld [vmem:[%s197] sm:$0x1]
    %v200 = vperm.slane %v194, 0
    %v202 = vmul.f32 %v191, %v200
    %v203 = vmul.f32 %v192, %v200
    %204 = vadd.xlane.f32.xlu0 %v202
    %v205 = vpop.xlane.xlu0 %204
    %206 = vadd.xlane.f32.xlu0 %v203
    %v207 = vpop.xlane.xlu0 %206
    %v209 = vperm.slane %v198, 0
    %v211 = vadd.f32 %v205, %v209
    %v212 = vadd.f32 %v207, %v209
    %v213 = vtanh.pop %v211
    %v214 = vtanh.pop %v212
    %v216 = vperm.slane %v196, 0
    %219 = vset.pattern.permute.xlu0 0
    %220 = vperm.xlu0 %219, %v213
    %v221 = vpop.permute.xlu0 %220
    %224 = vset.pattern.permute.xlu0 0
    %225 = vperm.xlu0 %224, %v214
    %v226 = vpop.permute.xlu0 %225
    %v228 = vmul.f32 %v216, %v221
    %v229 = vmul.f32 %v216, %v226
    %v230 = vadd.f32 %v191, %v228
    %v231 = vadd.f32 %v192, %v229
    %s232 = scalar_lea.vmem %s3, 3
    %v233 = vld [vmem:[%s232] sm:$0x1]
    %s234 = scalar_lea.vmem [#allocation7], 3
    %v235 = vld [vmem:[%s234] sm:$0x1]
    %s236 = scalar_lea.vmem %s5, 3
    %v237 = vld [vmem:[%s236] sm:$0x1]
    %v239 = vperm.slane %v233, 0
    %v241 = vmul.f32 %v230, %v239
    %v242 = vmul.f32 %v231, %v239
    %243 = vadd.xlane.f32.xlu0 %v241
    %v244 = vpop.xlane.xlu0 %243
    %245 = vadd.xlane.f32.xlu0 %v242
    %v246 = vpop.xlane.xlu0 %245
    %v248 = vperm.slane %v237, 0
    %v250 = vadd.f32 %v244, %v248
    %v251 = vadd.f32 %v246, %v248
    %v252 = vtanh.pop %v250
    %v253 = vtanh.pop %v251
    %v255 = vperm.slane %v235, 0
    %258 = vset.pattern.permute.xlu0 0
    %259 = vperm.xlu0 %258, %v252
    %v260 = vpop.permute.xlu0 %259
    %263 = vset.pattern.permute.xlu0 0
    %264 = vperm.xlu0 %263, %v253
    %v265 = vpop.permute.xlu0 %264
    %v267 = vmul.f32 %v255, %v260
    %v268 = vmul.f32 %v255, %v265
    %v269 = vadd.f32 %v230, %v267
    %v270 = vadd.f32 %v231, %v268
    %vm271 = vcmask 130048
    %272 = vst.msk [vmem:[#allocation8] sm:$0xff] %vm271, %v269
    %273 = vst.msk [vmem:[#allocation8 + $0x8] sm:$0xff] %vm271, %v270
    %276 = vrot.lane.b32.xlu0 %v269, 112
    %v277 = vpop.permute.xlu0 %276
    %278 = vrot.lane.b32.xlu0 %v270, 112
    %v279 = vpop.permute.xlu0 %278
    %vm282 = vcmask 916480
    %283 = vst.msk [vmem:[#allocation9] sm:$0xff] %vm282, %v277
    %284 = vst.msk [vmem:[#allocation9 + $0x8] sm:$0xff] %vm282, %v279
    // Predicated region
    $region38: #{tpu_custom_call.1} parent=1 // pred_check
      _
    $region39: #{tpu_custom_call.1} parent=1 // pred_check_branch
      %286 = sbr.rel (0) target = $region41
    $region40: #{tpu_custom_call.1} parent=1 // pred_region
      %288 = vsyncadd [#allocation4], 0
      %s289 = sshll.u32 [#allocation8], 4
      %s290 = int_to_ptr.vmem [resolvable:$true] %s289
      %s291 = sshll.u32 %s6, 4
      %s292 = int_to_ptr.hbm [resolvable:$true] %s291
      %297 = dma.vmem_to_hbm [thread:$0]  %s290, 256, %s292, [#allocation4], 128, 128, 8
    $region41: #{tpu_custom_call.1} parent=1 // pred_fallthru
      _
    // Predicated region
    $region42: #{tpu_custom_call.1} parent=1 // pred_check
      _
    $region43: #{tpu_custom_call.1} parent=1 // pred_check_branch
      %299 = sbr.rel (0) target = $region45
    $region44: #{tpu_custom_call.1} parent=1 // pred_region
      %301 = vsyncadd [#allocation10], 0
      %s302 = sshll.u32 [#allocation9], 4
      %s303 = int_to_ptr.vmem [resolvable:$true] %s302
      %s304 = sshll.u32 %s7, 4
      %s305 = int_to_ptr.hbm [resolvable:$true] %s304
      %310 = dma.vmem_to_hbm [thread:$0]  %s303, 256, %s305, [#allocation10], 128, 128, 8
    $region45: #{tpu_custom_call.1} parent=1 // pred_fallthru
      _
    // Predicated region
    $region46: #{tpu_custom_call.1} parent=1 // pred_check
      _
    $region47: #{tpu_custom_call.1} parent=1 // pred_check_branch
      %312 = sbr.rel (0) target = $region49
    $region48: #{tpu_custom_call.1} parent=1 // pred_region
      %314 = dma.done [#allocation4], 256
    $region49: #{tpu_custom_call.1} parent=1 // pred_fallthru
      _
    // Predicated region
    $region50: #{tpu_custom_call.1} parent=1 // pred_check
      _
    $region51: #{tpu_custom_call.1} parent=1 // pred_check_branch
      %316 = sbr.rel (0) target = $region53
    $region52: #{tpu_custom_call.1} parent=1 // pred_region
      %318 = dma.done [#allocation10], 256
    $region53: #{tpu_custom_call.1} parent=1 // pred_fallthru
      _
    %319 = vsyncpa [#allocation3], 1
    %320 = vsyncpa [#allocation6], 1
    %321 = vsyncpa [#allocation4], 1
    %322 = vsyncpa [#allocation10], 1

</llo_original>
